<compile_context>
chip_gen: v7x
topology: tpu7x:2x2x1
jax: 0.10.0
libtpu: 0.0.40
codegen_flags: <defaults>
</compile_context>

<pallas_src>
import jax
import jax.numpy as jnp
from jax import lax
from jax.experimental import pallas as pl
from jax.experimental.pallas import tpu as pltpu

LANES = 128
SUBLANES = 8
# Below this many latent elements, plain XLA beats a kernel launch for KLD.
KLD_KERNEL_MIN_ELEMS = 1 << 15

_CORE_PARALLEL = getattr(pltpu, "CORE_PARALLEL", "arbitrary")
_ARBITRARY = getattr(pltpu, "ARBITRARY", "arbitrary")


def _device_kind() -> str:
    try:
        return jax.devices()[0].device_kind.lower()
    except Exception:
        return ""


_KIND = _device_kind()
# Only v7x exposes 2 TensorCores behind one Pallas device; on single-TC
# v5e/v6e a core split is pure overhead (extra clamped DMA + second epilogue).
_NUM_CORE_SPLITS = 2 if ("v7" in _KIND or "7x" in _KIND) else 1
# 8192 rows * 128 lanes * 4 B = 4 MiB per f32 tile buffer; 2 inputs * 2
# pipeline buffers = 16 MiB on v6e/v7x (4096 rows -> 8 MiB elsewhere).
_MAX_TILE_ROWS = 8192 if ("v6" in _KIND or "v7" in _KIND or "7x" in _KIND) else 4096
# Plenty of headroom for tiles + elementwise temporaries; well under physical
# VMEM on every generation (v7x: 64 MiB physical).
_VMEM_LIMIT_BYTES = 48 * 1024 * 1024


def _round_up(x: int, m: int) -> int:
    return ((x + m - 1) // m) * m


def _streamed_sum(tile_fn, *arrays, flops_per_elem=3, transcendentals_per_elem=0):
    """sum(tile_fn(*arrays)) over all elements, streamed through VMEM.

    tile_fn maps same-shape f32 tiles to per-element f32 contributions and
    must map all-zero inputs to exactly 0 (so any zero padding is exact).
    Returns an f32 scalar.
    """
    n = int(arrays[0].size)
    flats = [jnp.reshape(a, (-1,)) for a in arrays]       # free (no-copy) reshape

    if n < SUBLANES * LANES:
        # Tiny input: a kernel launch costs more than the reduction itself.
        return jnp.sum(tile_fn(*[f.astype(jnp.float32) for f in flats]))

    rem = n % LANES
    if rem:
        # Rare: numel not lane-aligned.  Pad to the next multiple of 128 so the
        # (rows, 128) view exists; zero padding contributes exactly 0.
        # TODO(synk): stream the aligned prefix + tiny XLA tail to avoid this
        # full-array copy on lane-misaligned shapes.
        flats = [jnp.pad(f, (0, LANES - rem)) for f in flats]
    rows = (n + (LANES - rem) % LANES) // LANES
    arrs2d = [f.reshape(rows, LANES) for f in flats]      # free reshape

    itemsize = max(jnp.dtype(a.dtype).itemsize for a in arrays)
    cap = _MAX_TILE_ROWS * (2 if itemsize <= 2 else 1)    # keep DMA bytes ~constant
    tile_rows = min(cap, (rows // SUBLANES) * SUBLANES)   # multiple of 8, >= 8
    nblocks = pl.cdiv(rows, tile_rows)
    # Balance blocks so the trailing block is not nearly empty (minimizes the
    # over-read on the padded edge block).  This never changes nblocks.
    tile_rows = min(tile_rows, _round_up(pl.cdiv(rows, nblocks), SUBLANES))
    nblocks = pl.cdiv(rows, tile_rows)

    num_splits = _NUM_CORE_SPLITS if nblocks >= _NUM_CORE_SPLITS else 1
    bpc = pl.cdiv(nblocks, num_splits)                    # blocks per core
    # Does any block need masking (ragged tail or clamped duplicate)?
    has_tail = (rows % tile_rows != 0) or (num_splits * bpc != nblocks)

    def in_map(c, i):
        # Clamp so a core's empty trailing block re-reads a valid block; its
        # contribution is zeroed by the logical row mask below.
        return (jnp.minimum(c * bpc + i, nblocks - 1), 0)

    def kernel(*refs):
        *in_refs, out_ref, acc_ref = refs
        c = pl.program_id(0)
        i = pl.program_id(1)
        gb = c * bpc + i                                   # logical block index

        @pl.when(i == 0)
        def _():
            acc_ref[...] = jnp.zeros_like(acc_ref)

        vals = [r[...].astype(jnp.float32) for r in in_refs]
        contrib = tile_fn(*vals)

        def fold(x):
            # (tile_rows, 128) -> (tile_rows//8, 8, 128) -> one vreg (8, 128).
            return x.reshape(-1, SUBLANES, LANES).sum(axis=0)

        if has_tail:
            @pl.when(gb < nblocks - 1)
            def _():
                acc_ref[...] += fold(contrib)

            @pl.when(gb >= nblocks - 1)
            def _():
                # Mask BEFORE folding so stale block-padding rows (possibly
                # NaN/Inf, e.g. exp(garbage)) never reach the accumulator.
                row = (
                    lax.broadcasted_iota(jnp.int32, contrib.shape, 0)
                    + gb * tile_rows
                )
                acc_ref[...] += fold(jnp.where(row < rows, contrib, 0.0))
        else:
            acc_ref[...] += fold(contrib)

        # Single cross-lane/sublane reduce + SMEM scalar write, once per core.
        @pl.when(i == pl.num_programs(1) - 1)
        def _():
            out_ref[0, 0] = jnp.sum(acc_ref[...])

    in_bytes = sum(int(a.size) * jnp.dtype(a.dtype).itemsize for a in arrs2d)
    cost = pl.CostEstimate(
        flops=flops_per_elem * n,
        transcendentals=transcendentals_per_elem * n,
        bytes_accessed=in_bytes + 4 * num_splits,
    )

    partial = pl.pallas_call(
        kernel,
        out_shape=jax.ShapeDtypeStruct((num_splits, 1), jnp.float32),
        grid_spec=pltpu.PrefetchScalarGridSpec(
            num_scalar_prefetch=0,
            grid=(num_splits, bpc),
            in_specs=[pl.BlockSpec((tile_rows, LANES), in_map) for _ in arrs2d],
            out_specs=pl.BlockSpec(
                (1, 1), lambda c, i: (c, 0), memory_space=pltpu.MemorySpace.SMEM
            ),
            scratch_shapes=[pltpu.VMEM((SUBLANES, LANES), jnp.float32)],
        ),
        compiler_params=pltpu.CompilerParams(
            dimension_semantics=(
                _CORE_PARALLEL if num_splits > 1 else _ARBITRARY,
                _ARBITRARY,
            ),
            vmem_limit_bytes=_VMEM_LIMIT_BYTES,
        ),
        cost_estimate=cost,
    )(*arrs2d)
    return jnp.sum(partial)


def _mse_tile(xr, x):
    d = xr - x
    return d * d                                           # zero padding -> 0 exactly


def _kld_inner_tile(mu, lv):
    # zero padding -> 1 + 0 - 0 - exp(0) = 0 exactly
    return 1.0 + lv - mu * mu - jnp.exp(lv)


@jax.jit
def custom_loss(x_recon, x, mu, logvar):
    """Pallas equivalent of CustomLoss.forward: sum-MSE + KLD (f32 scalar)."""
    mse = _streamed_sum(_mse_tile, x_recon, x, flops_per_elem=3)
    if mu.size < KLD_KERNEL_MIN_ELEMS:
        # Typical VAE latent is a few KiB: plain XLA beats a kernel launch.
        kld_inner = jnp.sum(
            _kld_inner_tile(mu.astype(jnp.float32), logvar.astype(jnp.float32))
        )
    else:
        kld_inner = _streamed_sum(
            _kld_inner_tile, mu, logvar, flops_per_elem=5, transcendentals_per_elem=1
        )
    return mse - 0.5 * kld_inner


def _reference_loss(x_recon, x, mu, logvar):
    loss_mse = jnp.sum((x_recon - x) ** 2)
    loss_kld = -0.5 * jnp.sum(1.0 + logvar - mu**2 - jnp.exp(logvar))
    return loss_mse + loss_kld


if __name__ == "__main__":
    keys = jax.random.split(jax.random.PRNGKey(0), 12)

    # Small shapes consistent with a conv VAE: NCHW recon/target, flat latent.
    x_recon = jax.random.normal(keys[0], (2, 4, 16, 16), jnp.float32)
    x = jax.random.normal(keys[1], (2, 4, 16, 16), jnp.float32)
    mu = jax.random.normal(keys[2], (2, 32), jnp.float32)
    logvar = 0.5 * jax.random.normal(keys[3], (2, 32), jnp.float32)

    loss = custom_loss(x_recon, x, mu, logvar)
    jax.block_until_ready(loss)
    ref = _reference_loss(x_recon, x, mu, logvar)
    assert jnp.allclose(loss, ref, rtol=1e-5, atol=1e-4), (loss, ref)

    # Lane-aligned (numel % 128 == 0) but multi-block + ragged vs tile_rows:
    # exercises the streamed multi-block path and the masked tail block with
    # no jnp.pad copy.
    xr_big = jax.random.normal(keys[4], (8, 9, 100, 100), jnp.float32)
    x_big = jax.random.normal(keys[5], (8, 9, 100, 100), jnp.float32)
    mu_big = jax.random.normal(keys[6], (8, 64), jnp.float32)
    lv_big = 0.5 * jax.random.normal(keys[7], (8, 64), jnp.float32)

    loss_big = custom_loss(xr_big, x_big, mu_big, lv_big)
    jax.block_until_ready(loss_big)
    ref_big = _reference_loss(xr_big, x_big, mu_big, lv_big)
    assert jnp.allclose(loss_big, ref_big, rtol=1e-4, atol=1e-2), (loss_big, ref_big)

    # Non-lane-aligned numel (3*5*7*11 = 1155): exercises the rare pad branch
    # plus a ragged 2-block grid with an 8-row tile.
    xr_odd = jax.random.normal(keys[8], (3, 5, 7, 11), jnp.float32)
    x_odd = jax.random.normal(keys[9], (3, 5, 7, 11), jnp.float32)
    mu_odd = jax.random.normal(keys[10], (3, 11), jnp.float32)
    lv_odd = 0.5 * jax.random.normal(keys[11], (3, 11), jnp.float32)

    loss_odd = custom_loss(xr_odd, x_odd, mu_odd, lv_odd)
    jax.block_until_ready(loss_odd)
    ref_odd = _reference_loss(xr_odd, x_odd, mu_odd, lv_odd)
    assert jnp.allclose(loss_odd, ref_odd, rtol=1e-5, atol=1e-3), (loss_odd, ref_odd)

    print("KERNEL_OK")
</pallas_src>

<mosaic_0001>
module attributes {stable_mosaic.version = 11 : i64} {
  func.func @kernel(%arg0: i32, %arg1: i32, %arg2: memref<16x128xf32, #tpu.memory_space<vmem>>, %arg3: memref<16x128xf32, #tpu.memory_space<vmem>>, %arg4: memref<1x1xf32, #tpu.memory_space<smem>>, %arg5: memref<8x128xf32, #tpu.memory_space<vmem>>) attributes {dimension_semantics = [#tpu.dimension_semantics<arbitrary>, #tpu.dimension_semantics<arbitrary>], iteration_bounds = array<i64: 1, 1>, scalar_prefetch = 0 : i64, scratch_operands = 1 : i64, tpu.core_type = #tpu.core_type<tc>, window_params = [{transform_indices = @transform_0, window_bounds = array<i64: 16, 128>}, {transform_indices = @transform_1, window_bounds = array<i64: 16, 128>}, {transform_indices = @transform_2, window_bounds = array<i64: 1, 1>}]} {
    %c0_i32 = arith.constant 0 : i32
    %0 = arith.cmpi eq, %arg1, %c0_i32 : i32
    %1 = arith.extui %0 : i1 to i32
    %c0_i32_0 = arith.constant 0 : i32
    %2 = arith.cmpi ne, %1, %c0_i32_0 : i32
    scf.if %2 {
      %cst_10 = arith.constant 0.000000e+00 : f32
      %15 = vector.broadcast %cst_10 : f32 to vector<8x128xf32>
      %c0_11 = arith.constant 0 : index
      %c0_12 = arith.constant 0 : index
      %16 = vector.load %arg5[%c0_11, %c0_12] : memref<8x128xf32, #tpu.memory_space<vmem>>, vector<8x128xf32>
      tpu.vector_store %arg5[%c0_11, %c0_12], %15 {strides = array<i32>} : memref<8x128xf32, #tpu.memory_space<vmem>>, vector<8x128xf32>,
    } else {
    }
    %c0 = arith.constant 0 : index
    %c0_1 = arith.constant 0 : index
    %3 = vector.load %arg2[%c0, %c0_1] : memref<16x128xf32, #tpu.memory_space<vmem>>, vector<16x128xf32>
    %c0_2 = arith.constant 0 : index
    %c0_3 = arith.constant 0 : index
    %4 = vector.load %arg3[%c0_2, %c0_3] : memref<16x128xf32, #tpu.memory_space<vmem>>, vector<16x128xf32>
    %5 = arith.subf %3, %4 : vector<16x128xf32>
    %6 = arith.mulf %5, %5 : vector<16x128xf32>
    %c0_4 = arith.constant 0 : index
    %c0_5 = arith.constant 0 : index
    %7 = vector.load %arg5[%c0_4, %c0_5] : memref<8x128xf32, #tpu.memory_space<vmem>>, vector<8x128xf32>
    %8 = vector.shape_cast %6 : vector<16x128xf32> to vector<2x8x128xf32>
    %cst = arith.constant dense<0.000000e+00> : vector<8x128xf32>
    %9 = vector.multi_reduction <add>, %8, %cst [0] : vector<2x8x128xf32> to vector<8x128xf32>
    %10 = arith.addf %7, %9 : vector<8x128xf32>
    %c0_6 = arith.constant 0 : index
    %c0_7 = arith.constant 0 : index
    %11 = vector.load %arg5[%c0_6, %c0_7] : memref<8x128xf32, #tpu.memory_space<vmem>>, vector<8x128xf32>
    tpu.vector_store %arg5[%c0_6, %c0_7], %10 {strides = array<i32>} : memref<8x128xf32, #tpu.memory_space<vmem>>, vector<8x128xf32>,
    %c0_i32_8 = arith.constant 0 : i32
    %12 = arith.cmpi eq, %arg1, %c0_i32_8 : i32
    %13 = arith.extui %12 : i1 to i32
    %c0_i32_9 = arith.constant 0 : i32
    %14 = arith.cmpi ne, %13, %c0_i32_9 : i32
    scf.if %14 {
      %c0_10 = arith.constant 0 : index
      %c0_11 = arith.constant 0 : index
      %15 = vector.load %arg5[%c0_10, %c0_11] : memref<8x128xf32, #tpu.memory_space<vmem>>, vector<8x128xf32>
      %16 = vector.shape_cast %15 : vector<8x128xf32> to vector<1x8x128xf32>
      %cst_12 = arith.constant dense<0.000000e+00> : vector<1xf32>
      %17 = vector.multi_reduction <add>, %16, %cst_12 [1, 2] : vector<1x8x128xf32> to vector<1xf32>
      %18 = vector.shape_cast %17 : vector<1xf32> to vector<1x1x1xf32>
      %19 = vector.extract %18[0, 0, 0] : f32 from vector<1x1x1xf32>
      %c0_13 = arith.constant 0 : index
      %c0_14 = arith.constant 0 : index
      %20 = memref.load %arg4[%c0_13, %c0_14] : memref<1x1xf32, #tpu.memory_space<smem>>
      memref.store %19, %arg4[%c0_13, %c0_14] : memref<1x1xf32, #tpu.memory_space<smem>>
    } else {
    }
    return
  }
  func.func @transform_0(%arg0: i32, %arg1: i32) -> (i32, i32) {
    %c1_i32 = arith.constant 1 : i32
    %0 = arith.muli %arg0, %c1_i32 : i32
    %1 = arith.addi %0, %arg1 : i32
    %c0_i32 = arith.constant 0 : i32
    %2 = arith.minsi %1, %c0_i32 : i32
    %c0_i32_0 = arith.constant 0 : i32
    %c0_i32_1 = arith.constant 0 : i32
    return %2, %c0_i32_0 : i32, i32
  }
  func.func @transform_1(%arg0: i32, %arg1: i32) -> (i32, i32) {
    %c1_i32 = arith.constant 1 : i32
    %0 = arith.muli %arg0, %c1_i32 : i32
    %1 = arith.addi %0, %arg1 : i32
    %c0_i32 = arith.constant 0 : i32
    %2 = arith.minsi %1, %c0_i32 : i32
    %c0_i32_0 = arith.constant 0 : i32
    %c0_i32_1 = arith.constant 0 : i32
    return %2, %c0_i32_0 : i32, i32
  }
  func.func @transform_2(%arg0: i32, %arg1: i32) -> (i32, i32) {
    %c0_i32 = arith.constant 0 : i32
    %c0_i32_0 = arith.constant 0 : i32
    return %arg0, %c0_i32 : i32, i32
  }
}

</mosaic_0001>

<llo_original>
// kernel: custom_loss.1
$region0: #{custom_loss.1}
  #allocation0 [shape = 'u32[]', space=smem, size = 0x4, offset = 0x4, fixed_abs, tag = 'smem constant byte address 0x4 - core index']
  #allocation1 [shape = 'u32[144,128]{1,0:T(1,128)}', space=vmem, size = 0x12000, scoped, tag = 'internal scratch']
  #allocation2 [shape = 'f32[8,128]{1,0:T(8,128)}', space=vmem, size = 0x1000, scoped, tag = 'scratch operand']
  %s0 = inlined_call_operand.vmem [shape: f32[16,128], index: 0, kind: input, shape index: {}]
  %s1 = inlined_call_operand.vmem [shape: f32[16,128], index: 1, kind: input, shape index: {}]
  %s2 = inlined_call_operand.hbm [shape: f32[1,1], index: 2, kind: output, shape index: {}]
  %s3 = sld [smem:[#allocation0]]
  $region26: #{custom_loss.1} parent=0
    _
  %s5 = ssub.s32 1, %s3
  %s6 = scalar_select 0, %s5, %s3
  $region1: #{custom_loss.1} parent=0
    #allocation3 [shape = 'u8[512]{0}', space=smem, size = 0x200, scoped, tag = 'output window, operand 0, single buffered']
    #allocation4 [shape = 's32[1]{0}', space=sflag, size = 0x4, scoped, tag = 'scoped memory for custom_loss.1']
    %7 = vsyncpa [#allocation4], 0
    // Predicated region
    $region2: #{custom_loss.1} parent=1 // pred_check
      _
    $region3: #{custom_loss.1} parent=1 // pred_check_branch
      %9 = sbr.rel (0) target = $region5
    $region4: #{custom_loss.1} parent=1 // pred_region
      %s10 = sadd.s32 0, 0
      %p11 = scmp.lt.s32.totalorder %s10, 0
      %s12 = scalar_select %p11, %s10, 0
      %s13 = smul.u32 2, %s12
      %p14 = scmp.lt.s32.totalorder %s13, 1
      %s15 = scalar_select %p14, %s13, 1
      %s16 = smul.addr %s15, 8
      %s17 = scalar_lea.vmem %s0, %s16
      %s18 = sadd.s32 0, 0
      %p19 = scmp.lt.s32.totalorder %s18, 0
      %s20 = scalar_select %p19, %s18, 0
      %s21 = smul.u32 2, %s20
    $region5: #{custom_loss.1} parent=1 // pred_fallthru
      _
    // Predicated region
    $region6: #{custom_loss.1} parent=1 // pred_check
      _
    $region7: #{custom_loss.1} parent=1 // pred_check_branch
      %23 = sbr.rel (0) target = $region9
    $region8: #{custom_loss.1} parent=1 // pred_region
      %s24 = sadd.s32 0, 0
      %p25 = scmp.lt.s32.totalorder %s24, 0
      %s26 = scalar_select %p25, %s24, 0
      %s27 = smul.u32 2, %s26
      %p28 = scmp.lt.s32.totalorder %s27, 1
      %s29 = scalar_select %p28, %s27, 1
      %s30 = smul.addr %s29, 8
      %s31 = scalar_lea.vmem %s1, %s30
      %s32 = sadd.s32 0, 0
      %p33 = scmp.lt.s32.totalorder %s32, 0
      %s34 = scalar_select %p33, %s32, 0
      %s35 = smul.u32 2, %s34
    $region9: #{custom_loss.1} parent=1 // pred_fallthru
      _
    %s36 = sadd.s32 0, 0
    %p37 = scmp.lt.s32.totalorder %s36, 0
    %s38 = scalar_select %p37, %s36, 0
    %s39 = smul.u32 2, %s38
    %p40 = scmp.lt.s32.totalorder %s39, 1
    %s41 = scalar_select %p40, %s39, 1
    %s42 = smul.addr %s41, 8
    %s43 = scalar_lea.vmem %s0, %s42
    %s44 = sadd.s32 0, 0
    %p45 = scmp.lt.s32.totalorder %s44, 0
    %s46 = scalar_select %p45, %s44, 0
    %s47 = smul.u32 2, %s46
    %p48 = scmp.lt.s32.totalorder %s47, 1
    %s49 = scalar_select %p48, %s47, 1
    %s50 = smul.addr %s49, 8
    %s51 = scalar_lea.vmem %s1, %s50
    %s52 = sadd.s32 0, 0
    %p53 = scmp.lt.s32.totalorder %s52, 0
    %s54 = scalar_select %p53, %s52, 0
    %s55 = smul.u32 2, %s54
    %p56 = scmp.lt.s32.totalorder %s55, 1
    %s57 = scalar_select %p56, %s55, 1
    %s58 = smul.addr %s57, 8
    %s59 = scalar_lea.vmem %s0, %s58
    %s60 = sadd.s32 0, 0
    %p61 = scmp.lt.s32.totalorder %s60, 0
    %s62 = scalar_select %p61, %s60, 0
    %s63 = smul.u32 2, %s62
    %s64 = sadd.s32 0, 0
    %p65 = scmp.lt.s32.totalorder %s64, 0
    %s66 = scalar_select %p65, %s64, 0
    %s67 = smul.u32 2, %s66
    %p68 = scmp.lt.s32.totalorder %s67, 1
    %s69 = scalar_select %p68, %s67, 1
    %s70 = smul.addr %s69, 8
    %s71 = scalar_lea.vmem %s1, %s70
    %s72 = sadd.s32 0, 0
    %p73 = scmp.lt.s32.totalorder %s72, 0
    %s74 = scalar_select %p73, %s72, 0
    %s75 = smul.u32 2, %s74
    %p76 = scmp.eq.s32.totalorder 0, 0
    // Predicated region
    $region10: #{custom_loss.1} parent=1 // pred_check
      %p77 = pneg %p76
    $region11: #{custom_loss.1} parent=1 // pred_check_branch
      %79 = sbr.rel (%p77) target = $region13
    $region12: #{custom_loss.1} parent=1 // pred_region
      %80 = vst [vmem:[#allocation2] sm:$0xff] 0.0
    $region13: #{custom_loss.1} parent=1 // pred_fallthru
      _
    %v81 = vld [vmem:[%s59] sm:$0xff]
    %v82 = vld [vmem:[%s59 + $0x8] sm:$0xff]
    %v83 = vld [vmem:[%s71] sm:$0xff]
    %v84 = vld [vmem:[%s71 + $0x8] sm:$0xff]
    %v85 = vsub.f32 %v81, %v83
    %v86 = vsub.f32 %v82, %v84
    %v87 = vmul.f32 %v85, %v85
    %v88 = vmul.f32 %v86, %v86
    %v89 = vld [vmem:[#allocation2] sm:$0xff]
    %v90 = vadd.f32 %v87, %v88
    %v91 = vadd.f32 %v89, %v90
    %92 = vst [vmem:[#allocation2] sm:$0xff] %v91
    // Predicated region
    $region14: #{custom_loss.1} parent=1 // pred_check
      %p93 = pneg %p76
    $region15: #{custom_loss.1} parent=1 // pred_check_branch
      %95 = sbr.rel (%p93) target = $region17
    $region16: #{custom_loss.1} parent=1 // pred_region
      %v96 = vld [vmem:[#allocation2] sm:$0xff]
      %97 = vadd.xlane.f32.xlu0 %v96
      %v98 = vpop.xlane.xlu0 %97
      %v99 = vrot.slane %v98, 4
      %v100 = vadd.f32 %v98, %v99
      %v101 = vrot.slane %v100, 2
      %v102 = vadd.f32 %v100, %v101
      %v103 = vrot.slane %v102, 1
      %v104 = vadd.f32 %v102, %v103
      %s105 = vtos %v104
      %s106 = scalar_lea.smem [#allocation3], 0
      %107 = sst [smem:[%s106]] %s105
    $region17: #{custom_loss.1} parent=1 // pred_fallthru
      _
    // Predicated region
    $region18: #{custom_loss.1} parent=1 // pred_check
      _
    $region19: #{custom_loss.1} parent=1 // pred_check_branch
      %109 = sbr.rel (0) target = $region21
    $region20: #{custom_loss.1} parent=1 // pred_region
      %s111 = ssub.s32 16, 16
      %112 = vsyncadd [#allocation4], %s111
      %115 = dma.smem_to_hbm [#allocation3], 16, %s2, [#allocation4]
    $region21: #{custom_loss.1} parent=1 // pred_fallthru
      _
    // Predicated region
    $region22: #{custom_loss.1} parent=1 // pred_check
      _
    $region23: #{custom_loss.1} parent=1 // pred_check_branch
      %117 = sbr.rel (0) target = $region25
    $region24: #{custom_loss.1} parent=1 // pred_region
      %118 = dma.done [#allocation4], 16
    $region25: #{custom_loss.1} parent=1 // pred_fallthru
      _
    %119 = sfence
    %120 = vsyncpa [#allocation4], 1

</llo_original>
